<compile_context>
chip_gen: v6e
topology: v6e:2x2x1
jax: 0.10.0
libtpu: 0.0.40
codegen_flags: <defaults>
</compile_context>

<pallas_src>
import jax
import jax.numpy as jnp
from jax import lax
from jax.experimental import pallas as pl
from jax.experimental.pallas import tpu as pltpu


# ----------------------------------------------------------------------------- kernel
def _mlp_kernel(x_ref, w1_ref, b1_ref, w2_ref, b2_ref, w3_ref, b3_ref, o_ref):
    # x tile: (tb, D) straight from HBM (f32); cast to the MXU operand dtype here
    # so there is no separate XLA cast pass over x in HBM.
    x = x_ref[...].astype(w1_ref.dtype)

    # Layer 1 (transposed): h1T = W1 @ x^T, shape (64, tb).  Contract both operands
    # on their last dim (A @ B^T form) so the batch lands on lanes; every downstream
    # value and the final store are then lane-dense.
    h1 = lax.dot_general(w1_ref[...], x, (((1,), (1,)), ((), ())),
                         preferred_element_type=jnp.float32)
    h1 = jnp.maximum(h1 + b1_ref[...], 0.0)            # b1 is (64,1), broadcasts over lanes

    # Layer 2: h2T = W2 @ h1T, shape (32, tb).  Standard A @ B on the MXU.
    h2 = jnp.dot(w2_ref[...], h1.astype(w2_ref.dtype),
                 preferred_element_type=jnp.float32)
    h2 = jnp.maximum(h2 + b2_ref[...], 0.0)

    # Layer 3: logitsT = w3 @ h2T + b3, shape (1, tb).  Kept in f32 (K=32 is tiny);
    # the M=1 x N=tb result is already lane-dense, so it doubles as the relayout
    # for the store (replaces the old per-row (tb,1) masked-store path).
    logits = jnp.dot(w3_ref[...], h2, preferred_element_type=jnp.float32) + b3_ref[0]

    # Elementwise epilogue stays f32 (v5e VPU/EUP have no bf16 path).
    o_ref[...] = jax.nn.sigmoid(logits).astype(o_ref.dtype)


# --------------------------------------------------------------------------- helpers
def _round_up(n, m):
    return ((n + m - 1) // m) * m


def _round_down(n, m):
    return (n // m) * m


def _cdiv(a, b):
    return (a + b - 1) // b


def _padded_vmem_bytes(shape, dtype):
    """VMEM footprint of a 2-D buffer after Mosaic (sublane, lane) tile padding."""
    r, c = shape
    itemsize = jnp.dtype(dtype).itemsize
    sublane = 8 * (4 // itemsize) if itemsize < 4 else 8   # 8 for f32, 16 for bf16
    return _round_up(max(r, 1), sublane) * _round_up(max(c, 1), 128) * itemsize


def _choose_tile(B, D, tile_b, target_x_block_bytes):
    """Pick the batch-tile size (rows of x per grid step) and the grid length."""
    if B <= 128:
        # Tiny batch: one block covering the whole array (block shape == array shape,
        # so no (8,128) divisibility constraints, no clipping, no padding).
        return B, 1
    # VMEM cost per x row (f32, lane-padded to 128).
    row_bytes = _round_up(D, 128) * 4
    tb = max(128, _round_down(target_x_block_bytes // row_bytes, 128))
    if tile_b is not None:
        tb = min(tb, max(128, _round_up(tile_b, 128)))
    # Keep >= 2 grid steps once B allows it: feeds both v7x TensorCores under
    # dimension_semantics=("parallel",) and lets tile i+1's DMA overlap compute of
    # tile i even on single-TC v5e/v6e.
    tb = min(tb, max(128, _round_up(_cdiv(B, 2), 128)))
    # Block rows <= array rows, multiple of 128 (required by the (1, tb) out block).
    tb = min(tb, _round_down(B, 128))
    return tb, _cdiv(B, tb)


def _estimate_vmem_bytes(tb, D, compute_dtype):
    """Padding-aware VMEM estimate: pipelined blocks + resident weights + spills."""
    f32 = jnp.float32
    est = 0
    est += 2 * _padded_vmem_bytes((tb, D), f32)            # x tiles (double-buffered)
    est += 2 * _padded_vmem_bytes((1, tb), f32)            # out tiles (double-buffered)
    for shp, dt in (((64, D), compute_dtype), ((64, 1), f32),
                    ((32, 64), compute_dtype), ((32, 1), f32), ((1, 32), f32)):
        est += 2 * _padded_vmem_bytes(shp, dt)             # resident weights/biases
    # In-kernel intermediates (values this large live in VMEM, not vregs).
    est += _padded_vmem_bytes((tb, D), compute_dtype)      # x cast
    est += 2 * _padded_vmem_bytes((64, tb), f32)           # h1 pre/post ReLU
    est += _padded_vmem_bytes((64, tb), compute_dtype)     # h1 cast
    est += 2 * _padded_vmem_bytes((32, tb), f32)           # h2 pre/post ReLU
    est += 2 * _padded_vmem_bytes((1, tb), f32)            # logits / sigmoid
    return est


# --------------------------------------------------------------------------- wrapper
def binary_classification_forward(x, params, *, tile_b=None,
                                  target_x_block_bytes=6 << 20,
                                  compute_dtype=jnp.bfloat16):
    """Forward pass of BinaryClassificationModel.

    x: (B, input_dim) array (float32, or bfloat16 straight from the producer).
    params: PyTorch-layout weights: w1 (64, D), b1 (64,), w2 (32, 64), b2 (32,),
            w3 (1, 32), b3 (1,).  Returns sigmoid probabilities of shape (B, 1).

    target_x_block_bytes: VMEM budget per (double-buffered) x tile.  The ~6 MiB
    default is safe for v7x's 64 MiB VMEM; on v5e/v6e (128 MiB) ~16 MiB amortizes
    per-step overhead slightly better.
    """
    assert x.ndim == 2, "expected (batch, input_dim) input"
    B, D = x.shape

    tb, num_tiles = _choose_tile(B, D, tile_b, target_x_block_bytes)

    # Weights stay in their native PyTorch (out, in) layout.  Matmul operands in the
    # requested MXU dtype, everything elementwise-facing in f32.  (These casts are
    # tiny; pre-cast params once outside a serving/training loop to skip them.)
    w1 = jnp.asarray(params["w1"], compute_dtype).reshape(64, D)
    w2 = jnp.asarray(params["w2"], compute_dtype).reshape(32, 64)
    w3 = jnp.asarray(params["w3"], jnp.float32).reshape(1, 32)
    b1 = jnp.asarray(params["b1"], jnp.float32).reshape(64, 1)
    b2 = jnp.asarray(params["b2"], jnp.float32).reshape(32, 1)
    b3 = jnp.asarray(params["b3"], jnp.float32).reshape(1)

    vmem_limit = max(32 << 20,
                     min(int(1.25 * _estimate_vmem_bytes(tb, D, compute_dtype)),
                         112 << 20))

    out = pl.pallas_call(
        _mlp_kernel,
        out_shape=jax.ShapeDtypeStruct((1, B), jnp.float32),
        grid=(num_tiles,),
        in_specs=[
            pl.BlockSpec((tb, D), lambda i: (i, 0)),                # x: tiled over batch
            pl.BlockSpec((64, D), lambda i: (0, 0)),                # W1: resident
            pl.BlockSpec((64, 1), lambda i: (0, 0)),                # b1: resident
            pl.BlockSpec((32, 64), lambda i: (0, 0)),               # W2: resident
            pl.BlockSpec((32, 1), lambda i: (0, 0)),                # b2: resident
            pl.BlockSpec((1, 32), lambda i: (0, 0)),                # w3: resident
            pl.BlockSpec(memory_space=pltpu.MemorySpace.SMEM),      # b3 scalar in SMEM
        ],
        out_specs=pl.BlockSpec((1, tb), lambda i: (0, i)),          # lane-dense output
        compiler_params=pltpu.CompilerParams(
            dimension_semantics=("parallel",),
            vmem_limit_bytes=vmem_limit,
        ),
    )(x, w1, b1, w2, b2, w3, b3)

    # (1, B) -> (B, 1); tiny relative to the x read (<= 1/D of HBM traffic).
    return out.reshape(B, 1)


# ------------------------------------------------------------------------ test setup
def init_params(input_dim, key):
    """PyTorch nn.Linear-style init: weights (out, in), uniform(+/- 1/sqrt(fan_in))."""
    ks = jax.random.split(key, 6)

    def linear(kw, kb, fan_in, fan_out):
        bound = 1.0 / float(fan_in) ** 0.5
        w = jax.random.uniform(kw, (fan_out, fan_in), jnp.float32, -bound, bound)
        b = jax.random.uniform(kb, (fan_out,), jnp.float32, -bound, bound)
        return w, b

    w1, b1 = linear(ks[0], ks[1], input_dim, 64)
    w2, b2 = linear(ks[2], ks[3], 64, 32)
    w3, b3 = linear(ks[4], ks[5], 32, 1)
    return {"w1": w1, "b1": b1, "w2": w2, "b2": b2, "w3": w3, "b3": b3}


def _reference(x, p):
    h1 = jnp.maximum(x @ p["w1"].T + p["b1"], 0.0)
    h2 = jnp.maximum(h1 @ p["w2"].T + p["b2"], 0.0)
    return jax.nn.sigmoid(h2 @ p["w3"].T + p["b3"])


if __name__ == "__main__":
    key = jax.random.PRNGKey(0)
    k_x, k_p, k_x2 = jax.random.split(key, 3)

    batch, input_dim = 8, 32
    x = jax.random.normal(k_x, (batch, input_dim), dtype=jnp.float32)
    params = init_params(input_dim, k_p)
    ref = _reference(x, params)

    # f32 MXU operands, single full-array block (B <= 128 path).  Tolerance leaves
    # margin for generation-dependent MXU f32 pass decomposition.
    out_f32 = jax.block_until_ready(
        binary_classification_forward(x, params, compute_dtype=jnp.float32))
    assert out_f32.shape == (batch, 1)
    assert jnp.allclose(out_f32, ref, atol=5e-3, rtol=0), "f32 path mismatch"

    # Default bf16 MXU operands (f32 accumulate / f32 epilogue): relaxed tolerance.
    out_bf16 = jax.block_until_ready(binary_classification_forward(x, params))
    assert out_bf16.shape == (batch, 1)
    assert jnp.allclose(out_bf16, ref, atol=3e-2, rtol=0), "bf16 path mismatch"

    # Multi-tile grid with a ragged, clipped last block (no jnp.pad):
    # B=200, tile=128 -> 2 grid steps, second block clipped to 72 rows.
    batch2 = 200
    x2 = jax.random.normal(k_x2, (batch2, input_dim), dtype=jnp.float32)
    ref2 = _reference(x2, params)
    out2 = jax.block_until_ready(
        binary_classification_forward(x2, params, tile_b=128,
                                      compute_dtype=jnp.float32))
    assert out2.shape == (batch2, 1)
    assert jnp.allclose(out2, ref2, atol=5e-3, rtol=0), "multi-tile path mismatch"

    print("KERNEL_OK")
</pallas_src>

<mosaic_0001>
module attributes {stable_mosaic.version = 11 : i64} {
  func.func @_mlp_kernel(%arg0: i32, %arg1: memref<8x32xf32, #tpu.memory_space<vmem>>, %arg2: memref<64x32xf32, #tpu.memory_space<vmem>>, %arg3: memref<64x1xf32, #tpu.memory_space<vmem>>, %arg4: memref<32x64xf32, #tpu.memory_space<vmem>>, %arg5: memref<32x1xf32, #tpu.memory_space<vmem>>, %arg6: memref<1x32xf32, #tpu.memory_space<vmem>>, %arg7: memref<1xf32, #tpu.memory_space<smem>>, %arg8: memref<1x8xf32, #tpu.memory_space<vmem>>) attributes {dimension_semantics = [#tpu.dimension_semantics<parallel>], iteration_bounds = array<i64: 1>, scalar_prefetch = 0 : i64, scratch_operands = 0 : i64, tpu.core_type = #tpu.core_type<tc>, window_params = [{transform_indices = @transform_0, window_bounds = array<i64: 8, 32>}, {pipeline_mode = #tpu.pipeline_mode<synchronous>, transform_indices = @transform_1, window_bounds = array<i64: 64, 32>}, {pipeline_mode = #tpu.pipeline_mode<synchronous>, transform_indices = @transform_2, window_bounds = array<i64: 64, 1>}, {pipeline_mode = #tpu.pipeline_mode<synchronous>, transform_indices = @transform_3, window_bounds = array<i64: 32, 64>}, {pipeline_mode = #tpu.pipeline_mode<synchronous>, transform_indices = @transform_4, window_bounds = array<i64: 32, 1>}, {pipeline_mode = #tpu.pipeline_mode<synchronous>, transform_indices = @transform_5, window_bounds = array<i64: 1, 32>}, {transform_indices = @transform_6, window_bounds = array<i64: 1>}, {transform_indices = @transform_7, window_bounds = array<i64: 1, 8>}]} {
    %c0 = arith.constant 0 : index
    %c0_0 = arith.constant 0 : index
    %0 = vector.load %arg1[%c0, %c0_0] : memref<8x32xf32, #tpu.memory_space<vmem>>, vector<8x32xf32>
    %c0_1 = arith.constant 0 : index
    %c0_2 = arith.constant 0 : index
    %1 = vector.load %arg2[%c0_1, %c0_2] : memref<64x32xf32, #tpu.memory_space<vmem>>, vector<64x32xf32>
    %cst = arith.constant dense<0.000000e+00> : vector<64x8xf32>
    %2 = tpu.matmul %1, %0, %cst {dimension_numbers = #tpu.dot_dimension_numbers<[1], [1], [0], [0], [0, 0, 1, 0], [], []>} : vector<64x32xf32>, vector<8x32xf32>, vector<64x8xf32> -> vector<64x8xf32>
    %c0_3 = arith.constant 0 : index
    %c0_4 = arith.constant 0 : index
    %3 = vector.load %arg3[%c0_3, %c0_4] : memref<64x1xf32, #tpu.memory_space<vmem>>, vector<64x1xf32>
    %4 = vector.broadcast %3 : vector<64x1xf32> to vector<64x8xf32>
    %5 = arith.addf %2, %4 : vector<64x8xf32>
    %cst_5 = arith.constant 0.000000e+00 : f32
    %6 = vector.broadcast %cst_5 : f32 to vector<64x8xf32>
    %7 = arith.maximumf %5, %6 : vector<64x8xf32>
    %c0_6 = arith.constant 0 : index
    %c0_7 = arith.constant 0 : index
    %8 = vector.load %arg4[%c0_6, %c0_7] : memref<32x64xf32, #tpu.memory_space<vmem>>, vector<32x64xf32>
    %cst_8 = arith.constant dense<0.000000e+00> : vector<32x8xf32>
    %9 = tpu.matmul %8, %7, %cst_8 {dimension_numbers = #tpu.dot_dimension_numbers<[1], [0], [0], [1], [0, 0, 1, 1], [], []>} : vector<32x64xf32>, vector<64x8xf32>, vector<32x8xf32> -> vector<32x8xf32>
    %c0_9 = arith.constant 0 : index
    %c0_10 = arith.constant 0 : index
    %10 = vector.load %arg5[%c0_9, %c0_10] : memref<32x1xf32, #tpu.memory_space<vmem>>, vector<32x1xf32>
    %11 = vector.broadcast %10 : vector<32x1xf32> to vector<32x8xf32>
    %12 = arith.addf %9, %11 : vector<32x8xf32>
    %cst_11 = arith.constant 0.000000e+00 : f32
    %13 = vector.broadcast %cst_11 : f32 to vector<32x8xf32>
    %14 = arith.maximumf %12, %13 : vector<32x8xf32>
    %c0_12 = arith.constant 0 : index
    %c0_13 = arith.constant 0 : index
    %15 = vector.load %arg6[%c0_12, %c0_13] : memref<1x32xf32, #tpu.memory_space<vmem>>, vector<1x32xf32>
    %cst_14 = arith.constant dense<0.000000e+00> : vector<1x8xf32>
    %16 = tpu.matmul %15, %14, %cst_14 {dimension_numbers = #tpu.dot_dimension_numbers<[1], [0], [0], [1], [0, 0, 1, 1], [], []>} : vector<1x32xf32>, vector<32x8xf32>, vector<1x8xf32> -> vector<1x8xf32>
    %c0_15 = arith.constant 0 : index
    %17 = memref.load %arg7[%c0_15] : memref<1xf32, #tpu.memory_space<smem>>
    %18 = vector.broadcast %17 : f32 to vector<1x8xf32>
    %19 = arith.addf %16, %18 : vector<1x8xf32>
    %20 = arith.negf %19 : vector<1x8xf32>
    %21 = math.exp %20 : vector<1x8xf32>
    %cst_16 = arith.constant 1.000000e+00 : f32
    %22 = vector.broadcast %cst_16 : f32 to vector<1x8xf32>
    %23 = arith.addf %22, %21 : vector<1x8xf32>
    %24 = arith.divf %22, %23 : vector<1x8xf32>
    %c0_17 = arith.constant 0 : index
    %c0_18 = arith.constant 0 : index
    %25 = vector.load %arg8[%c0_17, %c0_18] : memref<1x8xf32, #tpu.memory_space<vmem>>, vector<1x8xf32>
    tpu.vector_store %arg8[%c0_17, %c0_18], %24 {strides = array<i32>} : memref<1x8xf32, #tpu.memory_space<vmem>>, vector<1x8xf32>,
    return
  }
  func.func @transform_0(%arg0: i32) -> (i32, i32) {
    %c0_i32 = arith.constant 0 : i32
    %c0_i32_0 = arith.constant 0 : i32
    return %arg0, %c0_i32 : i32, i32
  }
  func.func @transform_1(%arg0: i32) -> (i32, i32) {
    %c0_i32 = arith.constant 0 : i32
    %c0_i32_0 = arith.constant 0 : i32
    %c0_i32_1 = arith.constant 0 : i32
    return %c0_i32, %c0_i32_0 : i32, i32
  }
  func.func @transform_2(%arg0: i32) -> (i32, i32) {
    %c0_i32 = arith.constant 0 : i32
    %c0_i32_0 = arith.constant 0 : i32
    %c0_i32_1 = arith.constant 0 : i32
    return %c0_i32, %c0_i32_0 : i32, i32
  }
  func.func @transform_3(%arg0: i32) -> (i32, i32) {
    %c0_i32 = arith.constant 0 : i32
    %c0_i32_0 = arith.constant 0 : i32
    %c0_i32_1 = arith.constant 0 : i32
    return %c0_i32, %c0_i32_0 : i32, i32
  }
  func.func @transform_4(%arg0: i32) -> (i32, i32) {
    %c0_i32 = arith.constant 0 : i32
    %c0_i32_0 = arith.constant 0 : i32
    %c0_i32_1 = arith.constant 0 : i32
    return %c0_i32, %c0_i32_0 : i32, i32
  }
  func.func @transform_5(%arg0: i32) -> (i32, i32) {
    %c0_i32 = arith.constant 0 : i32
    %c0_i32_0 = arith.constant 0 : i32
    %c0_i32_1 = arith.constant 0 : i32
    return %c0_i32, %c0_i32_0 : i32, i32
  }
  func.func @transform_6(%arg0: i32) -> i32 {
    %c0_i32 = arith.constant 0 : i32
    %c0_i32_0 = arith.constant 0 : i32
    return %c0_i32 : i32
  }
  func.func @transform_7(%arg0: i32) -> (i32, i32) {
    %c0_i32 = arith.constant 0 : i32
    %c0_i32_0 = arith.constant 0 : i32
    return %c0_i32, %arg0 : i32, i32
  }
}

</mosaic_0001>

<llo_original>
// kernel: tpu_custom_call.1
$region0: #{tpu_custom_call.1}
  #allocation0 [shape = 'u32[]', space=smem, size = 0x4, offset = 0x4, fixed_abs, tag = 'smem constant byte address 0x4 - core index']
  #allocation1 [shape = 'u32[144,128]{1,0:T(1,128)}', space=vmem, size = 0x12000, scoped, tag = 'internal scratch']
  #allocation2 [shape = 'f32[1]{0:T(128)S(6)}', space=smem, size = 0x200, scoped, tag = 'scoped memory for tpu_custom_call.1']
  %s0 = inlined_call_operand.vmem [shape: f32[8,32], index: 0, kind: input, shape index: {}]
  %s1 = inlined_call_operand.vmem [shape: f32[64,32], index: 1, kind: input, shape index: {}]
  %s2 = inlined_call_operand.vmem [shape: f32[64,1], index: 2, kind: input, shape index: {}]
  %s3 = inlined_call_operand.vmem [shape: f32[32,64], index: 3, kind: input, shape index: {}]
  %s4 = inlined_call_operand.vmem [shape: f32[32,1], index: 4, kind: input, shape index: {}]
  %s5 = inlined_call_operand.vmem [shape: f32[1,32], index: 5, kind: input, shape index: {}]
  %s6 = inlined_call_operand.<no memory space> [shape: f32[1], index: 6, kind: input, shape index: {}]
  %s7 = inlined_call_operand.hbm [shape: f32[1,8], index: 7, kind: output, shape index: {}]
  %s8 = sld [smem:[#allocation0]]
  $region38: #{tpu_custom_call.1} parent=0
    _
  %s10 = ssub.s32 1, %s8
  %s11 = scalar_select 0, %s10, %s8
  %12 = sst [smem:[#allocation2]] %s6
  $region1: #{tpu_custom_call.1} parent=0
    #allocation3 [shape = 'u8[512]{0}', space=vmem, size = 0x400, scoped, tag = 'output window, operand 0, single buffered']
    #allocation4 [shape = 's32[1]{0}', space=sflag, size = 0x4, scoped, tag = 'scoped memory for tpu_custom_call.1']
    %13 = vsyncpa [#allocation4], 0
    // Predicated region
    $region2: #{tpu_custom_call.1} parent=1 // pred_check
      _
    $region3: #{tpu_custom_call.1} parent=1 // pred_check_branch
      %15 = sbr.rel (0) target = $region5
    $region4: #{tpu_custom_call.1} parent=1 // pred_region
      _
    $region5: #{tpu_custom_call.1} parent=1 // pred_fallthru
      _
    // Predicated region
    $region6: #{tpu_custom_call.1} parent=1 // pred_check
      _
    $region7: #{tpu_custom_call.1} parent=1 // pred_check_branch
      %17 = sbr.rel (0) target = $region9
    $region8: #{tpu_custom_call.1} parent=1 // pred_region
      _
    $region9: #{tpu_custom_call.1} parent=1 // pred_fallthru
      _
    // Predicated region
    $region10: #{tpu_custom_call.1} parent=1 // pred_check
      _
    $region11: #{tpu_custom_call.1} parent=1 // pred_check_branch
      %19 = sbr.rel (0) target = $region13
    $region12: #{tpu_custom_call.1} parent=1 // pred_region
      _
    $region13: #{tpu_custom_call.1} parent=1 // pred_fallthru
      _
    // Predicated region
    $region14: #{tpu_custom_call.1} parent=1 // pred_check
      _
    $region15: #{tpu_custom_call.1} parent=1 // pred_check_branch
      %21 = sbr.rel (0) target = $region17
    $region16: #{tpu_custom_call.1} parent=1 // pred_region
      _
    $region17: #{tpu_custom_call.1} parent=1 // pred_fallthru
      _
    // Predicated region
    $region18: #{tpu_custom_call.1} parent=1 // pred_check
      _
    $region19: #{tpu_custom_call.1} parent=1 // pred_check_branch
      %23 = sbr.rel (0) target = $region21
    $region20: #{tpu_custom_call.1} parent=1 // pred_region
      _
    $region21: #{tpu_custom_call.1} parent=1 // pred_fallthru
      _
    // Predicated region
    $region22: #{tpu_custom_call.1} parent=1 // pred_check
      _
    $region23: #{tpu_custom_call.1} parent=1 // pred_check_branch
      %25 = sbr.rel (0) target = $region25
    $region24: #{tpu_custom_call.1} parent=1 // pred_region
      _
    $region25: #{tpu_custom_call.1} parent=1 // pred_fallthru
      _
    // Predicated region
    $region26: #{tpu_custom_call.1} parent=1 // pred_check
      _
    $region27: #{tpu_custom_call.1} parent=1 // pred_check_branch
      %27 = sbr.rel (0) target = $region29
    $region28: #{tpu_custom_call.1} parent=1 // pred_region
      _
    $region29: #{tpu_custom_call.1} parent=1 // pred_fallthru
      _
    %v28 = vld [vmem:[%s0] sm:$0xff]
    %v29 = vld [vmem:[%s1] sm:$0xff]
    %v30 = vld [vmem:[%s1 + $0x8] sm:$0xff]
    %v31 = vld [vmem:[%s1 + $0x10] sm:$0xff]
    %v32 = vld [vmem:[%s1 + $0x18] sm:$0xff]
    %v33 = vld [vmem:[%s1 + $0x20] sm:$0xff]
    %v34 = vld [vmem:[%s1 + $0x28] sm:$0xff]
    %v35 = vld [vmem:[%s1 + $0x30] sm:$0xff]
    %v36 = vld [vmem:[%s1 + $0x38] sm:$0xff]
    %v37 = vld [vmem:[%s2] sm:$0xff]
    %v38 = vld [vmem:[%s2 + $0x8] sm:$0xff]
    %v39 = vld [vmem:[%s2 + $0x10] sm:$0xff]
    %v40 = vld [vmem:[%s2 + $0x18] sm:$0xff]
    %v41 = vld [vmem:[%s2 + $0x20] sm:$0xff]
    %v42 = vld [vmem:[%s2 + $0x28] sm:$0xff]
    %v43 = vld [vmem:[%s2 + $0x30] sm:$0xff]
    %v44 = vld [vmem:[%s2 + $0x38] sm:$0xff]
    %46 = vset.pattern.permute.xlu0 0
    %47 = vperm.xlu0 %46, %v37
    %v48 = vpop.permute.xlu0 %47
    %51 = vset.pattern.permute.xlu0 0
    %52 = vperm.xlu0 %51, %v38
    %v53 = vpop.permute.xlu0 %52
    %56 = vset.pattern.permute.xlu0 0
    %57 = vperm.xlu0 %56, %v39
    %v58 = vpop.permute.xlu0 %57
    %61 = vset.pattern.permute.xlu0 0
    %62 = vperm.xlu0 %61, %v40
    %v63 = vpop.permute.xlu0 %62
    %66 = vset.pattern.permute.xlu0 0
    %67 = vperm.xlu0 %66, %v41
    %v68 = vpop.permute.xlu0 %67
    %71 = vset.pattern.permute.xlu0 0
    %72 = vperm.xlu0 %71, %v42
    %v73 = vpop.permute.xlu0 %72
    %76 = vset.pattern.permute.xlu0 0
    %77 = vperm.xlu0 %76, %v43
    %v78 = vpop.permute.xlu0 %77
    %81 = vset.pattern.permute.xlu0 0
    %82 = vperm.xlu0 %81, %v44
    %v83 = vpop.permute.xlu0 %82
    %vm85 = vcmask 261120
    %v87 = vsel %vm85, %v29, 0
    %v90 = vsel %vm85, %v30, 0
    %v93 = vsel %vm85, %v31, 0
    %v96 = vsel %vm85, %v32, 0
    %v99 = vsel %vm85, %v33, 0
    %v102 = vsel %vm85, %v34, 0
    %v105 = vsel %vm85, %v35, 0
    %v108 = vsel %vm85, %v36, 0
    %v111 = vsel %vm85, %v28, 0
    %113 = vmatprep.subr.mxu0 0.0
    %114 = vmatpush1.xpose.msra.mxu0 0.0
    %115 = vmatprep.subr.mxu0 0.0
    %116 = vmatpush1.xpose.msra.mxu0 0.0
    %117 = vmatprep.subr.mxu0 0.0
    %118 = vmatpush1.xpose.msra.mxu0 0.0
    %119 = vmatprep.subr.mxu0 0.0
    %120 = vmatpush1.xpose.msra.mxu0 0.0
    %121 = vmatprep.subr.mxu0 0.0
    %122 = vmatpush1.xpose.msra.mxu0 0.0
    %123 = vmatprep.subr.mxu0 0.0
    %124 = vmatpush1.xpose.msra.mxu0 0.0
    %125 = vmatprep.subr.mxu0 0.0
    %126 = vmatpush1.xpose.msra.mxu0 0.0
    %127 = vmatprep.subr.mxu0 0.0
    %128 = vmatpush1.xpose.msra.mxu0 0.0
    %129 = vmatprep.subr.mxu0 0.0
    %130 = vmatpush1.xpose.msra.mxu0 0.0
    %131 = vmatprep.subr.mxu0 0.0
    %132 = vmatpush1.xpose.msra.mxu0 0.0
    %133 = vmatprep.subr.mxu0 0.0
    %134 = vmatpush1.xpose.msra.mxu0 0.0
    %135 = vmatprep.subr.mxu0 0.0
    %136 = vmatpush1.xpose.msra.mxu0 0.0
    %137 = vmatprep.subr.mxu0 0.0
    %138 = vmatpush1.xpose.msra.mxu0 0.0
    %139 = vmatprep.subr.mxu0 0.0
    %140 = vmatpush1.xpose.msra.mxu0 0.0
    %141 = vmatprep.subr.mxu0 0.0
    %142 = vmatpush1.xpose.msra.mxu0 0.0
    %143 = vmatprep.subr.mxu0 0.0
    %144 = vmatpush1.xpose.msra.mxu0 %v111
    %145 = vmatprep.subr.mxu0 0.0
    %146 = vmatpush2.xpose.msra.mxu0 0.0
    %147 = vmatprep.subr.mxu0 0.0
    %148 = vmatpush2.xpose.msra.mxu0 0.0
    %149 = vmatprep.subr.mxu0 0.0
    %150 = vmatpush2.xpose.msra.mxu0 0.0
    %151 = vmatprep.subr.mxu0 0.0
    %152 = vmatpush2.xpose.msra.mxu0 0.0
    %153 = vmatprep.subr.mxu0 0.0
    %154 = vmatpush2.xpose.msra.mxu0 0.0
    %155 = vmatprep.subr.mxu0 0.0
    %156 = vmatpush2.xpose.msra.mxu0 0.0
    %157 = vmatprep.subr.mxu0 0.0
    %158 = vmatpush2.xpose.msra.mxu0 0.0
    %159 = vmatprep.subr.mxu0 0.0
    %160 = vmatpush2.xpose.msra.mxu0 0.0
    %161 = vmatprep.subr.mxu0 0.0
    %162 = vmatpush2.xpose.msra.mxu0 0.0
    %163 = vmatprep.subr.mxu0 0.0
    %164 = vmatpush2.xpose.msra.mxu0 0.0
    %165 = vmatprep.subr.mxu0 0.0
    %166 = vmatpush2.xpose.msra.mxu0 0.0
    %167 = vmatprep.subr.mxu0 0.0
    %168 = vmatpush2.xpose.msra.mxu0 0.0
    %169 = vmatprep.subr.mxu0 0.0
    %170 = vmatpush2.xpose.msra.mxu0 0.0
    %171 = vmatprep.subr.mxu0 0.0
    %172 = vmatpush2.xpose.msra.mxu0 0.0
    %173 = vmatprep.subr.mxu0 0.0
    %174 = vmatpush2.xpose.msra.mxu0 0.0
    %175 = vmatprep.subr.mxu0 0.0
    %176 = vmatpush2.xpose.msra.mxu0 0.0
    %177 = vmatprep.mubr.f32.mxu0 0.0
    %178 = vmatmul.mubr.f32.gmra.mxu0 %v87
    %v179 = vpop.f32.mrf.mxu0
    %v180 = vadd.f32 %v48, %v179
    %v181 = vpop.f32.mrf.mxu0
    %182 = vmatprep.mubr.f32.mxu0 0.0
    %183 = vmatmul.mubr.f32.gmra.mxu0 %v90
    %v184 = vpop.f32.mrf.mxu0
    %v185 = vadd.f32 %v53, %v184
    %v186 = vpop.f32.mrf.mxu0
    %187 = vmatprep.mubr.f32.mxu0 0.0
    %188 = vmatmul.mubr.f32.gmra.mxu0 %v93
    %v189 = vpop.f32.mrf.mxu0
    %v190 = vadd.f32 %v58, %v189
    %v191 = vpop.f32.mrf.mxu0
    %192 = vmatprep.mubr.f32.mxu0 0.0
    %193 = vmatmul.mubr.f32.gmra.mxu0 %v96
    %v194 = vpop.f32.mrf.mxu0
    %v195 = vadd.f32 %v63, %v194
    %v196 = vpop.f32.mrf.mxu0
    %197 = vmatprep.mubr.f32.mxu0 0.0
    %198 = vmatmul.mubr.f32.gmra.mxu0 %v99
    %v199 = vpop.f32.mrf.mxu0
    %v200 = vadd.f32 %v68, %v199
    %v201 = vpop.f32.mrf.mxu0
    %202 = vmatprep.mubr.f32.mxu0 0.0
    %203 = vmatmul.mubr.f32.gmra.mxu0 %v102
    %v204 = vpop.f32.mrf.mxu0
    %v205 = vadd.f32 %v73, %v204
    %v206 = vpop.f32.mrf.mxu0
    %207 = vmatprep.mubr.f32.mxu0 0.0
    %208 = vmatmul.mubr.f32.gmra.mxu0 %v105
    %v209 = vpop.f32.mrf.mxu0
    %v210 = vadd.f32 %v78, %v209
    %v211 = vpop.f32.mrf.mxu0
    %212 = vmatprep.mubr.f32.mxu0 0.0
    %213 = vmatmul.mubr.f32.gmra.mxu0 %v108
    %v214 = vpop.f32.mrf.mxu0
    %v215 = vadd.f32 %v83, %v214
    %v216 = vpop.f32.mrf.mxu0
    %217 = vdwg.mxu0
    %v218 = vmax.f32 %v180, 0.0
    %v219 = vmax.f32 %v185, 0.0
    %v220 = vmax.f32 %v190, 0.0
    %v221 = vmax.f32 %v195, 0.0
    %v222 = vmax.f32 %v200, 0.0
    %v223 = vmax.f32 %v205, 0.0
    %v224 = vmax.f32 %v210, 0.0
    %v225 = vmax.f32 %v215, 0.0
    %v226 = vld [vmem:[%s3] sm:$0xff]
    %v227 = vld [vmem:[%s3 + $0x8] sm:$0xff]
    %v228 = vld [vmem:[%s3 + $0x10] sm:$0xff]
    %v229 = vld [vmem:[%s3 + $0x18] sm:$0xff]
    %v230 = vld [vmem:[%s4] sm:$0xff]
    %v231 = vld [vmem:[%s4 + $0x8] sm:$0xff]
    %v232 = vld [vmem:[%s4 + $0x10] sm:$0xff]
    %v233 = vld [vmem:[%s4 + $0x18] sm:$0xff]
    %235 = vset.pattern.permute.xlu0 0
    %236 = vperm.xlu0 %235, %v230
    %v237 = vpop.permute.xlu0 %236
    %240 = vset.pattern.permute.xlu0 0
    %241 = vperm.xlu0 %240, %v231
    %v242 = vpop.permute.xlu0 %241
    %245 = vset.pattern.permute.xlu0 0
    %246 = vperm.xlu0 %245, %v232
    %v247 = vpop.permute.xlu0 %246
    %250 = vset.pattern.permute.xlu0 0
    %251 = vperm.xlu0 %250, %v233
    %v252 = vpop.permute.xlu0 %251
    %vm254 = vcmask 523264
    %v256 = vsel %vm254, %v226, 0
    %v259 = vsel %vm254, %v227, 0
    %v262 = vsel %vm254, %v228, 0
    %v265 = vsel %vm254, %v229, 0
    %267 = vmatprep.subr.mxu0 0.0
    %268 = vmatpush1.msra.mxu0 0.0
    %269 = vmatprep.subr.mxu0 0.0
    %270 = vmatpush1.msra.mxu0 0.0
    %271 = vmatprep.subr.mxu0 0.0
    %272 = vmatpush1.msra.mxu0 0.0
    %273 = vmatprep.subr.mxu0 0.0
    %274 = vmatpush1.msra.mxu0 0.0
    %275 = vmatprep.subr.mxu0 0.0
    %276 = vmatpush1.msra.mxu0 0.0
    %277 = vmatprep.subr.mxu0 0.0
    %278 = vmatpush1.msra.mxu0 0.0
    %279 = vmatprep.subr.mxu0 0.0
    %280 = vmatpush1.msra.mxu0 0.0
    %281 = vmatprep.subr.mxu0 0.0
    %282 = vmatpush1.msra.mxu0 0.0
    %283 = vmatprep.subr.mxu0 0.0
    %284 = vmatpush1.msra.mxu0 %v225
    %285 = vmatprep.subr.mxu0 0.0
    %286 = vmatpush1.msra.mxu0 %v224
    %287 = vmatprep.subr.mxu0 0.0
    %288 = vmatpush1.msra.mxu0 %v223
    %289 = vmatprep.subr.mxu0 0.0
    %290 = vmatpush1.msra.mxu0 %v222
    %291 = vmatprep.subr.mxu0 0.0
    %292 = vmatpush1.msra.mxu0 %v221
    %293 = vmatprep.subr.mxu0 0.0
    %294 = vmatpush1.msra.mxu0 %v220
    %295 = vmatprep.subr.mxu0 0.0
    %296 = vmatpush1.msra.mxu0 %v219
    %297 = vmatprep.subr.mxu0 0.0
    %298 = vmatpush1.msra.mxu0 %v218
    %299 = vmatprep.subr.mxu0 0.0
    %300 = vmatpush2.msra.mxu0 0.0
    %301 = vmatprep.subr.mxu0 0.0
    %302 = vmatpush2.msra.mxu0 0.0
    %303 = vmatprep.subr.mxu0 0.0
    %304 = vmatpush2.msra.mxu0 0.0
    %305 = vmatprep.subr.mxu0 0.0
    %306 = vmatpush2.msra.mxu0 0.0
    %307 = vmatprep.subr.mxu0 0.0
    %308 = vmatpush2.msra.mxu0 0.0
    %309 = vmatprep.subr.mxu0 0.0
    %310 = vmatpush2.msra.mxu0 0.0
    %311 = vmatprep.subr.mxu0 0.0
    %312 = vmatpush2.msra.mxu0 0.0
    %313 = vmatprep.subr.mxu0 0.0
    %314 = vmatpush2.msra.mxu0 0.0
    %315 = vmatprep.subr.mxu0 0.0
    %316 = vmatpush2.msra.mxu0 0.0
    %317 = vmatprep.subr.mxu0 0.0
    %318 = vmatpush2.msra.mxu0 0.0
    %319 = vmatprep.subr.mxu0 0.0
    %320 = vmatpush2.msra.mxu0 0.0
    %321 = vmatprep.subr.mxu0 0.0
    %322 = vmatpush2.msra.mxu0 0.0
    %323 = vmatprep.subr.mxu0 0.0
    %324 = vmatpush2.msra.mxu0 0.0
    %325 = vmatprep.subr.mxu0 0.0
    %326 = vmatpush2.msra.mxu0 0.0
    %327 = vmatprep.subr.mxu0 0.0
    %328 = vmatpush2.msra.mxu0 0.0
    %329 = vmatprep.subr.mxu0 0.0
    %330 = vmatpush2.msra.mxu0 0.0
    %331 = vmatprep.mubr.f32.mxu0 0.0
    %332 = vmatmul.mubr.f32.gmra.mxu0 %v256
    %v333 = vpop.f32.mrf.mxu0
    %v334 = vadd.f32 %v237, %v333
    %v335 = vpop.f32.mrf.mxu0
    %336 = vmatprep.mubr.f32.mxu0 0.0
    %337 = vmatmul.mubr.f32.gmra.mxu0 %v259
    %v338 = vpop.f32.mrf.mxu0
    %v339 = vadd.f32 %v242, %v338
    %v340 = vpop.f32.mrf.mxu0
    %341 = vmatprep.mubr.f32.mxu0 0.0
    %342 = vmatmul.mubr.f32.gmra.mxu0 %v262
    %v343 = vpop.f32.mrf.mxu0
    %v344 = vadd.f32 %v247, %v343
    %v345 = vpop.f32.mrf.mxu0
    %346 = vmatprep.mubr.f32.mxu0 0.0
    %347 = vmatmul.mubr.f32.gmra.mxu0 %v265
    %v348 = vpop.f32.mrf.mxu0
    %v349 = vadd.f32 %v252, %v348
    %v350 = vpop.f32.mrf.mxu0
    %351 = vdwg.mxu0
    %v352 = vmax.f32 %v334, 0.0
    %v353 = vmax.f32 %v339, 0.0
    %v354 = vmax.f32 %v344, 0.0
    %v355 = vmax.f32 %v349, 0.0
    %v356 = vld [vmem:[%s5] sm:$0x1]
    %s357 = sld [smem:[#allocation2]]
    %v358 = vstv %s357
    %v360 = vsel %vm85, %v356, 0
    %362 = vmatprep.subr.mxu0 0.0
    %363 = vmatpush1.msra.mxu0 0.0
    %364 = vmatprep.subr.mxu0 0.0
    %365 = vmatpush1.msra.mxu0 0.0
    %366 = vmatprep.subr.mxu0 0.0
    %367 = vmatpush1.msra.mxu0 0.0
    %368 = vmatprep.subr.mxu0 0.0
    %369 = vmatpush1.msra.mxu0 0.0
    %370 = vmatprep.subr.mxu0 0.0
    %371 = vmatpush1.msra.mxu0 0.0
    %372 = vmatprep.subr.mxu0 0.0
    %373 = vmatpush1.msra.mxu0 0.0
    %374 = vmatprep.subr.mxu0 0.0
    %375 = vmatpush1.msra.mxu0 0.0
    %376 = vmatprep.subr.mxu0 0.0
    %377 = vmatpush1.msra.mxu0 0.0
    %378 = vmatprep.subr.mxu0 0.0
    %379 = vmatpush1.msra.mxu0 0.0
    %380 = vmatprep.subr.mxu0 0.0
    %381 = vmatpush1.msra.mxu0 0.0
    %382 = vmatprep.subr.mxu0 0.0
    %383 = vmatpush1.msra.mxu0 0.0
    %384 = vmatprep.subr.mxu0 0.0
    %385 = vmatpush1.msra.mxu0 0.0
    %386 = vmatprep.subr.mxu0 0.0
    %387 = vmatpush1.msra.mxu0 %v355
    %388 = vmatprep.subr.mxu0 0.0
    %389 = vmatpush1.msra.mxu0 %v354
    %390 = vmatprep.subr.mxu0 0.0
    %391 = vmatpush1.msra.mxu0 %v353
    %392 = vmatprep.subr.mxu0 0.0
    %393 = vmatpush1.msra.mxu0 %v352
    %394 = vmatprep.subr.mxu0 0.0
    %395 = vmatpush2.msra.mxu0 0.0
    %396 = vmatprep.subr.mxu0 0.0
    %397 = vmatpush2.msra.mxu0 0.0
    %398 = vmatprep.subr.mxu0 0.0
    %399 = vmatpush2.msra.mxu0 0.0
    %400 = vmatprep.subr.mxu0 0.0
    %401 = vmatpush2.msra.mxu0 0.0
    %402 = vmatprep.subr.mxu0 0.0
    %403 = vmatpush2.msra.mxu0 0.0
    %404 = vmatprep.subr.mxu0 0.0
    %405 = vmatpush2.msra.mxu0 0.0
    %406 = vmatprep.subr.mxu0 0.0
    %407 = vmatpush2.msra.mxu0 0.0
    %408 = vmatprep.subr.mxu0 0.0
    %409 = vmatpush2.msra.mxu0 0.0
    %410 = vmatprep.subr.mxu0 0.0
    %411 = vmatpush2.msra.mxu0 0.0
    %412 = vmatprep.subr.mxu0 0.0
    %413 = vmatpush2.msra.mxu0 0.0
    %414 = vmatprep.subr.mxu0 0.0
    %415 = vmatpush2.msra.mxu0 0.0
    %416 = vmatprep.subr.mxu0 0.0
    %417 = vmatpush2.msra.mxu0 0.0
    %418 = vmatprep.subr.mxu0 0.0
    %419 = vmatpush2.msra.mxu0 0.0
    %420 = vmatprep.subr.mxu0 0.0
    %421 = vmatpush2.msra.mxu0 0.0
    %422 = vmatprep.subr.mxu0 0.0
    %423 = vmatpush2.msra.mxu0 0.0
    %424 = vmatprep.subr.mxu0 0.0
    %425 = vmatpush2.msra.mxu0 0.0
    %426 = vmatprep.mubr.f32.mxu0 0.0
    %427 = vmatmul.mubr.f32.gmra.mxu0 %v360
    %v428 = vpop.f32.mrf.mxu0
    %v429 = vadd.f32 %v358, %v428
    %v430 = vpop.f32.mrf.mxu0
    %431 = vdwg.mxu0
    %v432 = vxor.u32 %v429, 2147483648
    %v433 = vmul.f32 %v432, 1.442695
    %v434 = vpow.pop %v433
    %v435 = vadd.f32 %v434, 1.0
    %v436 = vrcp.pop %v435
    %v437 = vmul.f32 1.0, %v436
    %vm438 = vcmask 57344
    %439 = vst.msk [vmem:[#allocation3] sm:$0x1] %vm438, %v437
    // Predicated region
    $region30: #{tpu_custom_call.1} parent=1 // pred_check
      _
    $region31: #{tpu_custom_call.1} parent=1 // pred_check_branch
      %441 = sbr.rel (0) target = $region33
    $region32: #{tpu_custom_call.1} parent=1 // pred_region
      %s443 = ssub.s32 16, 16
      %444 = vsyncadd [#allocation4], %s443
      %s446 = sshll.u32 [#allocation3], 4
      %s447 = int_to_ptr.vmem [resolvable:$true] %s446
      %449 = dma.vmem_to_hbm [thread:$0]  %s447, 16, %s7, [#allocation4]
    $region33: #{tpu_custom_call.1} parent=1 // pred_fallthru
      _
    // Predicated region
    $region34: #{tpu_custom_call.1} parent=1 // pred_check
      _
    $region35: #{tpu_custom_call.1} parent=1 // pred_check_branch
      %451 = sbr.rel (0) target = $region37
    $region36: #{tpu_custom_call.1} parent=1 // pred_region
      %452 = dma.done [#allocation4], 16
    $region37: #{tpu_custom_call.1} parent=1 // pred_fallthru
      _
    %453 = vsyncpa [#allocation4], 1

</llo_original>
